<compile_context>
chip_gen: v7x
topology: tpu7x:2x2x1
jax: 0.10.0
libtpu: 0.0.40
codegen_flags: <defaults>
</compile_context>

<pallas_src>
import jax
import jax.numpy as jnp
from jax.experimental import pallas as pl
from jax.experimental.pallas import tpu as pltpu


def dnn_kernel(item_ref, user_ref, y_ref,
               w1i_ref, w1u_ref, b1_ref, w2_ref, b2_ref, wo_ref, bo_ref,
               logits_ref, probs_ref, bce_ref):
    """One batch tile, activations laid out (features, batch_tile)."""
    item_t = item_ref[...]          # (itm_dim,  TB)
    user_t = user_ref[...]          # (hist_dim, TB)  -- history SUM (1/L folded into w1u)

    # Layer 1: split matmul replaces concat([item, user]) @ W1.
    h1 = jnp.dot(w1i_ref[...], item_t, preferred_element_type=jnp.float32)
    h1 = h1 + jnp.dot(w1u_ref[...], user_t, preferred_element_type=jnp.float32)
    h1 = jnp.maximum(h1 + b1_ref[...], 0.0)                                   # (H1, TB)

    # Layer 2.
    h2 = jnp.dot(w2_ref[...], h1, preferred_element_type=jnp.float32) + b2_ref[...]
    h2 = jnp.maximum(h2, 0.0)                                                 # (H2, TB)

    # Final fc (out_dim = 1): VPU multiply + sublane reduce, not a skinny MXU pass.
    logits = jnp.sum(h2 * wo_ref[...], axis=0, keepdims=True) + bo_ref[...]   # (1, TB)
    logits_ref[...] = logits

    # get_ctr_output: clamp(sigmoid) + per-element BCE (mean taken in the wrapper).
    p = jnp.clip(jax.nn.sigmoid(logits), 1e-7, 1.0 - 1e-7)
    probs_ref[...] = p

    y = y_ref[...]                                                            # (1, TB)
    bce_ref[...] = -(y * jnp.log(p) + (1.0 - y) * jnp.log(1.0 - p))
    # TODO(synk): training-mode dropout not implemented (inference forward only).


def dnn_forward(item_emb, hist_emb, labels, params, *, tile_b=None):
    B, itm_dim = item_emb.shape
    _, L, hist_dim = hist_emb.shape

    w1, b1, w2, b2, wo, bo = (params[k] for k in ("w1", "b1", "w2", "b2", "wo", "bo"))
    h1_dim = w1.shape[1]
    h2_dim = w2.shape[1]

    # Kernel-friendly weight layouts (tiny; constant-folded under jit).
    w1_item_t = w1[:itm_dim, :].T                       # (H1, itm_dim)
    w1_user_t = (w1[itm_dim:, :] / float(L)).T          # (H1, hist_dim)  -- mean's 1/L folded in
    b1_col = b1.reshape(1, h1_dim).T                    # (H1, 1)
    w2_t = w2.T                                         # (H2, H1)
    b2_col = b2.reshape(1, h2_dim).T                    # (H2, 1)
    wo_col = wo.reshape(h2_dim, 1)                      # (H2, 1)
    bo_sc = bo.reshape(1, 1)                            # (1, 1)

    # Glue: pre-reduce history (cuts the dominant HBM operand by L) and transpose so
    # batch lands on the TPU lane axis.
    user_sum_t = jnp.sum(hist_emb, axis=1).T            # (hist_dim, B)
    item_t = item_emb.T                                 # (itm_dim, B)
    labels_t = labels.reshape(1, B).astype(jnp.float32) # (1, B)

    # Batch tile: multiple of 128 (lane width); modest so double-buffered tiles +
    # resident weights fit the scoped-VMEM default on every generation (v5e..v7x).
    if tile_b is None:
        tile_b = min(512, pl.cdiv(B, 128) * 128)
    padded_b = pl.cdiv(B, tile_b) * tile_b
    pad = padded_b - B
    if pad:
        item_t = jnp.pad(item_t, ((0, 0), (0, pad)))
        user_sum_t = jnp.pad(user_sum_t, ((0, 0), (0, pad)))
        labels_t = jnp.pad(labels_t, ((0, 0), (0, pad)))

    grid = (padded_b // tile_b,)

    def tile_spec(rows):
        return pl.BlockSpec((rows, tile_b), lambda i: (0, i))

    def resident_spec(arr):
        return pl.BlockSpec(arr.shape, lambda i: (0, 0))

    weight_elems = (w1_item_t.size + w1_user_t.size + b1_col.size +
                    w2_t.size + b2_col.size + wo_col.size + bo_sc.size)
    flops = 2 * padded_b * (itm_dim * h1_dim + hist_dim * h1_dim + h1_dim * h2_dim + h2_dim)
    bytes_accessed = 4 * (padded_b * (itm_dim + hist_dim + 1 + 3) + weight_elems)

    logits_t, probs_t, bce_t = pl.pallas_call(
        dnn_kernel,
        grid=grid,
        in_specs=[
            tile_spec(itm_dim),        # item_t
            tile_spec(hist_dim),       # user_sum_t
            tile_spec(1),              # labels_t
            resident_spec(w1_item_t),
            resident_spec(w1_user_t),
            resident_spec(b1_col),
            resident_spec(w2_t),
            resident_spec(b2_col),
            resident_spec(wo_col),
            resident_spec(bo_sc),
        ],
        out_specs=(tile_spec(1), tile_spec(1), tile_spec(1)),
        out_shape=(
            jax.ShapeDtypeStruct((1, padded_b), jnp.float32),   # raw logits
            jax.ShapeDtypeStruct((1, padded_b), jnp.float32),   # clamped sigmoid probs
            jax.ShapeDtypeStruct((1, padded_b), jnp.float32),   # per-element BCE
        ),
        compiler_params=pltpu.CompilerParams(
            dimension_semantics=("parallel",),
            vmem_limit_bytes=32 * 1024 * 1024,
        ),
        cost_estimate=pl.CostEstimate(
            flops=flops,
            transcendentals=3 * padded_b,
            bytes_accessed=bytes_accessed,
        ),
    )(item_t, user_sum_t, labels_t,
      w1_item_t, w1_user_t, b1_col, w2_t, b2_col, wo_col, bo_sc)

    # Drop padded columns; final mean over the real batch (BCELoss reduction='mean').
    loss = jnp.mean(bce_t[0, :B])
    raw_logits = logits_t[0, :B].reshape(B, 1)
    probs = probs_t[0, :B].reshape(B, 1)
    return {"logits": probs, "raw_logits": raw_logits, "labels": labels, "loss": loss}


if __name__ == "__main__":
    # ---- hyperparameters implied by the module ----
    batch = 8
    embed_dim = 8
    attr_fnum = 2
    max_hist_len = 8
    item_num, attr_num, rating_num = 50, 20, 5
    dnn_deep_arch = (64, 32)

    item_fnum = 1 + attr_fnum                 # iid + attrs
    hist_fnum = 2 + attr_fnum                 # iid + attrs + rating
    itm_emb_dim = item_fnum * embed_dim       # 24
    hist_emb_dim = hist_fnum * embed_dim      # 32
    inp_dim = itm_emb_dim + hist_emb_dim      # 56

    key = jax.random.PRNGKey(0)
    keys = jax.random.split(key, 16)

    # ---- deterministic embedding tables & MLP weights ----
    item_tab = jax.random.normal(keys[0], (item_num + 1, embed_dim), jnp.float32) * 0.1
    attr_tab = jax.random.normal(keys[1], (attr_num + 1, embed_dim), jnp.float32) * 0.1
    rate_tab = jax.random.normal(keys[2], (rating_num + 1, embed_dim), jnp.float32) * 0.1

    params = {
        "w1": jax.random.normal(keys[3], (inp_dim, dnn_deep_arch[0]), jnp.float32) * 0.05,
        "b1": jnp.zeros((1, dnn_deep_arch[0]), jnp.float32),
        "w2": jax.random.normal(keys[4], (dnn_deep_arch[0], dnn_deep_arch[1]), jnp.float32) * 0.05,
        "b2": jnp.zeros((1, dnn_deep_arch[1]), jnp.float32),
        "wo": jax.random.normal(keys[5], (dnn_deep_arch[1], 1), jnp.float32) * 0.05,
        "bo": jnp.zeros((1, 1), jnp.float32),
    }

    # ---- synthetic integer-id inputs (what process_input consumes) ----
    hist_iid = jax.random.randint(keys[6], (batch, max_hist_len), 0, item_num + 1)
    hist_aid = jax.random.randint(keys[7], (batch, max_hist_len, attr_fnum), 0, attr_num + 1)
    hist_rate = jax.random.randint(keys[8], (batch, max_hist_len), 0, rating_num + 1)
    iid = jax.random.randint(keys[9], (batch,), 0, item_num + 1)
    aid = jax.random.randint(keys[10], (batch, attr_fnum), 0, attr_num + 1)
    labels = jax.random.randint(keys[11], (batch,), 0, 2)

    # ---- plain-JAX glue: embedding lookups + per-field concat (process_input) ----
    hist_item_emb = item_tab[hist_iid]                                  # (B, L, E)
    hist_attr_emb = attr_tab[hist_aid].reshape(batch, max_hist_len, embed_dim * attr_fnum)
    hist_rate_emb = rate_tab[hist_rate]                                 # (B, L, E)
    hist_emb = jnp.concatenate([hist_item_emb, hist_attr_emb, hist_rate_emb], axis=-1)

    iid_emb = item_tab[iid]                                             # (B, E)
    attr_emb = attr_tab[aid].reshape(batch, embed_dim * attr_fnum)      # (B, E*attr_fnum)
    item_emb = jnp.concatenate([iid_emb, attr_emb], axis=-1)            # (B, itm_emb_dim)

    # ---- Pallas kernel: MLP + fc + sigmoid + BCE (history pre-reduced in glue) ----
    out = dnn_forward(item_emb, hist_emb, labels, params)
    jax.block_until_ready(out["loss"])

    # ---- sanity check against plain-JAX reference ----
    user = jnp.mean(hist_emb, axis=1)
    x = jnp.concatenate([item_emb, user], axis=1)
    h1 = jnp.maximum(x @ params["w1"] + params["b1"], 0.0)
    h2 = jnp.maximum(h1 @ params["w2"] + params["b2"], 0.0)
    ref_logits = h2 @ params["wo"] + params["bo"]
    ref_p = jnp.clip(jax.nn.sigmoid(ref_logits), 1e-7, 1 - 1e-7)
    y = labels.reshape(-1, 1).astype(jnp.float32)
    ref_loss = jnp.mean(-(y * jnp.log(ref_p) + (1 - y) * jnp.log(1 - ref_p)))

    assert jnp.allclose(out["raw_logits"], ref_logits, atol=1e-5), "logits mismatch"
    assert jnp.allclose(out["logits"], ref_p, atol=1e-5), "probs mismatch"
    assert jnp.allclose(out["loss"], ref_loss, atol=1e-5), "loss mismatch"

    print("KERNEL_OK")
</pallas_src>

<mosaic_0001>
module attributes {stable_mosaic.version = 11 : i64} {
  func.func @dnn_kernel(%arg0: i32, %arg1: memref<24x128xf32, #tpu.memory_space<vmem>>, %arg2: memref<32x128xf32, #tpu.memory_space<vmem>>, %arg3: memref<1x128xf32, #tpu.memory_space<vmem>>, %arg4: memref<64x24xf32, #tpu.memory_space<vmem>>, %arg5: memref<64x32xf32, #tpu.memory_space<vmem>>, %arg6: memref<64x1xf32, #tpu.memory_space<vmem>>, %arg7: memref<32x64xf32, #tpu.memory_space<vmem>>, %arg8: memref<32x1xf32, #tpu.memory_space<vmem>>, %arg9: memref<32x1xf32, #tpu.memory_space<vmem>>, %arg10: memref<1x1xf32, #tpu.memory_space<vmem>>, %arg11: memref<1x128xf32, #tpu.memory_space<vmem>>, %arg12: memref<1x128xf32, #tpu.memory_space<vmem>>, %arg13: memref<1x128xf32, #tpu.memory_space<vmem>>) attributes {dimension_semantics = [#tpu.dimension_semantics<parallel>], iteration_bounds = array<i64: 1>, scalar_prefetch = 0 : i64, scratch_operands = 0 : i64, tpu.core_type = #tpu.core_type<tc>, window_params = [{transform_indices = @transform_0, window_bounds = array<i64: 24, 128>}, {transform_indices = @transform_1, window_bounds = array<i64: 32, 128>}, {transform_indices = @transform_2, window_bounds = array<i64: 1, 128>}, {pipeline_mode = #tpu.pipeline_mode<synchronous>, transform_indices = @transform_3, window_bounds = array<i64: 64, 24>}, {pipeline_mode = #tpu.pipeline_mode<synchronous>, transform_indices = @transform_4, window_bounds = array<i64: 64, 32>}, {pipeline_mode = #tpu.pipeline_mode<synchronous>, transform_indices = @transform_5, window_bounds = array<i64: 64, 1>}, {pipeline_mode = #tpu.pipeline_mode<synchronous>, transform_indices = @transform_6, window_bounds = array<i64: 32, 64>}, {pipeline_mode = #tpu.pipeline_mode<synchronous>, transform_indices = @transform_7, window_bounds = array<i64: 32, 1>}, {pipeline_mode = #tpu.pipeline_mode<synchronous>, transform_indices = @transform_8, window_bounds = array<i64: 32, 1>}, {pipeline_mode = #tpu.pipeline_mode<synchronous>, transform_indices = @transform_9, window_bounds = array<i64: 1, 1>}, {transform_indices = @transform_10, window_bounds = array<i64: 1, 128>}, {transform_indices = @transform_11, window_bounds = array<i64: 1, 128>}, {transform_indices = @transform_12, window_bounds = array<i64: 1, 128>}]} {
    %c0 = arith.constant 0 : index
    %c0_0 = arith.constant 0 : index
    %0 = vector.load %arg1[%c0, %c0_0] : memref<24x128xf32, #tpu.memory_space<vmem>>, vector<24x128xf32>
    %c0_1 = arith.constant 0 : index
    %c0_2 = arith.constant 0 : index
    %1 = vector.load %arg2[%c0_1, %c0_2] : memref<32x128xf32, #tpu.memory_space<vmem>>, vector<32x128xf32>
    %c0_3 = arith.constant 0 : index
    %c0_4 = arith.constant 0 : index
    %2 = vector.load %arg4[%c0_3, %c0_4] : memref<64x24xf32, #tpu.memory_space<vmem>>, vector<64x24xf32>
    %cst = arith.constant dense<0.000000e+00> : vector<64x128xf32>
    %3 = tpu.matmul %2, %0, %cst {dimension_numbers = #tpu.dot_dimension_numbers<[1], [0], [0], [1], [0, 0, 1, 1], [], []>} : vector<64x24xf32>, vector<24x128xf32>, vector<64x128xf32> -> vector<64x128xf32>
    %c0_5 = arith.constant 0 : index
    %c0_6 = arith.constant 0 : index
    %4 = vector.load %arg5[%c0_5, %c0_6] : memref<64x32xf32, #tpu.memory_space<vmem>>, vector<64x32xf32>
    %cst_7 = arith.constant dense<0.000000e+00> : vector<64x128xf32>
    %5 = tpu.matmul %4, %1, %cst_7 {dimension_numbers = #tpu.dot_dimension_numbers<[1], [0], [0], [1], [0, 0, 1, 1], [], []>} : vector<64x32xf32>, vector<32x128xf32>, vector<64x128xf32> -> vector<64x128xf32>
    %6 = arith.addf %3, %5 : vector<64x128xf32>
    %c0_8 = arith.constant 0 : index
    %c0_9 = arith.constant 0 : index
    %7 = vector.load %arg6[%c0_8, %c0_9] : memref<64x1xf32, #tpu.memory_space<vmem>>, vector<64x1xf32>
    %8 = vector.broadcast %7 : vector<64x1xf32> to vector<64x128xf32>
    %9 = arith.addf %6, %8 : vector<64x128xf32>
    %cst_10 = arith.constant 0.000000e+00 : f32
    %10 = vector.broadcast %cst_10 : f32 to vector<64x128xf32>
    %11 = arith.maximumf %9, %10 : vector<64x128xf32>
    %c0_11 = arith.constant 0 : index
    %c0_12 = arith.constant 0 : index
    %12 = vector.load %arg7[%c0_11, %c0_12] : memref<32x64xf32, #tpu.memory_space<vmem>>, vector<32x64xf32>
    %cst_13 = arith.constant dense<0.000000e+00> : vector<32x128xf32>
    %13 = tpu.matmul %12, %11, %cst_13 {dimension_numbers = #tpu.dot_dimension_numbers<[1], [0], [0], [1], [0, 0, 1, 1], [], []>} : vector<32x64xf32>, vector<64x128xf32>, vector<32x128xf32> -> vector<32x128xf32>
    %c0_14 = arith.constant 0 : index
    %c0_15 = arith.constant 0 : index
    %14 = vector.load %arg8[%c0_14, %c0_15] : memref<32x1xf32, #tpu.memory_space<vmem>>, vector<32x1xf32>
    %15 = vector.broadcast %14 : vector<32x1xf32> to vector<32x128xf32>
    %16 = arith.addf %13, %15 : vector<32x128xf32>
    %cst_16 = arith.constant 0.000000e+00 : f32
    %17 = vector.broadcast %cst_16 : f32 to vector<32x128xf32>
    %18 = arith.maximumf %16, %17 : vector<32x128xf32>
    %c0_17 = arith.constant 0 : index
    %c0_18 = arith.constant 0 : index
    %19 = vector.load %arg9[%c0_17, %c0_18] : memref<32x1xf32, #tpu.memory_space<vmem>>, vector<32x1xf32>
    %20 = vector.broadcast %19 : vector<32x1xf32> to vector<32x128xf32>
    %21 = arith.mulf %18, %20 : vector<32x128xf32>
    %cst_19 = arith.constant dense<0.000000e+00> : vector<128xf32>
    %22 = vector.multi_reduction <add>, %21, %cst_19 [0] : vector<32x128xf32> to vector<128xf32>
    %23 = vector.shape_cast %22 : vector<128xf32> to vector<1x128xf32>
    %c0_20 = arith.constant 0 : index
    %c0_21 = arith.constant 0 : index
    %24 = vector.load %arg10[%c0_20, %c0_21] : memref<1x1xf32, #tpu.memory_space<vmem>>, vector<1x1xf32>
    %25 = vector.broadcast %24 : vector<1x1xf32> to vector<1x128xf32>
    %26 = arith.addf %23, %25 : vector<1x128xf32>
    %c0_22 = arith.constant 0 : index
    %c0_23 = arith.constant 0 : index
    %27 = vector.load %arg11[%c0_22, %c0_23] : memref<1x128xf32, #tpu.memory_space<vmem>>, vector<1x128xf32>
    tpu.vector_store %arg11[%c0_22, %c0_23], %26 {strides = array<i32>} : memref<1x128xf32, #tpu.memory_space<vmem>>, vector<1x128xf32>,
    %28 = arith.negf %26 : vector<1x128xf32>
    %29 = math.exp %28 : vector<1x128xf32>
    %cst_24 = arith.constant 1.000000e+00 : f32
    %30 = vector.broadcast %cst_24 : f32 to vector<1x128xf32>
    %31 = arith.addf %30, %29 : vector<1x128xf32>
    %32 = arith.divf %30, %31 : vector<1x128xf32>
    %cst_25 = arith.constant 1.000000e-07 : f32
    %cst_26 = arith.constant 0.99999988 : f32
    %33 = vector.broadcast %cst_25 : f32 to vector<1x128xf32>
    %34 = arith.maximumf %33, %32 : vector<1x128xf32>
    %35 = vector.broadcast %cst_26 : f32 to vector<1x128xf32>
    %36 = arith.minimumf %35, %34 : vector<1x128xf32>
    %c0_27 = arith.constant 0 : index
    %c0_28 = arith.constant 0 : index
    %37 = vector.load %arg12[%c0_27, %c0_28] : memref<1x128xf32, #tpu.memory_space<vmem>>, vector<1x128xf32>
    tpu.vector_store %arg12[%c0_27, %c0_28], %36 {strides = array<i32>} : memref<1x128xf32, #tpu.memory_space<vmem>>, vector<1x128xf32>,
    %c0_29 = arith.constant 0 : index
    %c0_30 = arith.constant 0 : index
    %38 = vector.load %arg3[%c0_29, %c0_30] : memref<1x128xf32, #tpu.memory_space<vmem>>, vector<1x128xf32>
    %39 = math.log %36 : vector<1x128xf32>
    %40 = arith.mulf %38, %39 : vector<1x128xf32>
    %cst_31 = arith.constant 1.000000e+00 : f32
    %41 = vector.broadcast %cst_31 : f32 to vector<1x128xf32>
    %42 = arith.subf %41, %38 : vector<1x128xf32>
    %cst_32 = arith.constant 1.000000e+00 : f32
    %43 = vector.broadcast %cst_32 : f32 to vector<1x128xf32>
    %44 = arith.subf %43, %36 : vector<1x128xf32>
    %45 = math.log %44 : vector<1x128xf32>
    %46 = arith.mulf %42, %45 : vector<1x128xf32>
    %47 = arith.addf %40, %46 : vector<1x128xf32>
    %cst_33 = arith.constant 0.000000e+00 : f32
    %48 = vector.broadcast %cst_33 : f32 to vector<1x128xf32>
    %49 = arith.subf %48, %47 : vector<1x128xf32>
    %c0_34 = arith.constant 0 : index
    %c0_35 = arith.constant 0 : index
    %50 = vector.load %arg13[%c0_34, %c0_35] : memref<1x128xf32, #tpu.memory_space<vmem>>, vector<1x128xf32>
    tpu.vector_store %arg13[%c0_34, %c0_35], %49 {strides = array<i32>} : memref<1x128xf32, #tpu.memory_space<vmem>>, vector<1x128xf32>,
    return
  }
  func.func @transform_0(%arg0: i32) -> (i32, i32) {
    %c0_i32 = arith.constant 0 : i32
    %c0_i32_0 = arith.constant 0 : i32
    return %c0_i32, %arg0 : i32, i32
  }
  func.func @transform_1(%arg0: i32) -> (i32, i32) {
    %c0_i32 = arith.constant 0 : i32
    %c0_i32_0 = arith.constant 0 : i32
    return %c0_i32, %arg0 : i32, i32
  }
  func.func @transform_2(%arg0: i32) -> (i32, i32) {
    %c0_i32 = arith.constant 0 : i32
    %c0_i32_0 = arith.constant 0 : i32
    return %c0_i32, %arg0 : i32, i32
  }
  func.func @transform_3(%arg0: i32) -> (i32, i32) {
    %c0_i32 = arith.constant 0 : i32
    %c0_i32_0 = arith.constant 0 : i32
    %c0_i32_1 = arith.constant 0 : i32
    return %c0_i32, %c0_i32_0 : i32, i32
  }
  func.func @transform_4(%arg0: i32) -> (i32, i32) {
    %c0_i32 = arith.constant 0 : i32
    %c0_i32_0 = arith.constant 0 : i32
    %c0_i32_1 = arith.constant 0 : i32
    return %c0_i32, %c0_i32_0 : i32, i32
  }
  func.func @transform_5(%arg0: i32) -> (i32, i32) {
    %c0_i32 = arith.constant 0 : i32
    %c0_i32_0 = arith.constant 0 : i32
    %c0_i32_1 = arith.constant 0 : i32
    return %c0_i32, %c0_i32_0 : i32, i32
  }
  func.func @transform_6(%arg0: i32) -> (i32, i32) {
    %c0_i32 = arith.constant 0 : i32
    %c0_i32_0 = arith.constant 0 : i32
    %c0_i32_1 = arith.constant 0 : i32
    return %c0_i32, %c0_i32_0 : i32, i32
  }
  func.func @transform_7(%arg0: i32) -> (i32, i32) {
    %c0_i32 = arith.constant 0 : i32
    %c0_i32_0 = arith.constant 0 : i32
    %c0_i32_1 = arith.constant 0 : i32
    return %c0_i32, %c0_i32_0 : i32, i32
  }
  func.func @transform_8(%arg0: i32) -> (i32, i32) {
    %c0_i32 = arith.constant 0 : i32
    %c0_i32_0 = arith.constant 0 : i32
    %c0_i32_1 = arith.constant 0 : i32
    return %c0_i32, %c0_i32_0 : i32, i32
  }
  func.func @transform_9(%arg0: i32) -> (i32, i32) {
    %c0_i32 = arith.constant 0 : i32
    %c0_i32_0 = arith.constant 0 : i32
    %c0_i32_1 = arith.constant 0 : i32
    return %c0_i32, %c0_i32_0 : i32, i32
  }
  func.func @transform_10(%arg0: i32) -> (i32, i32) {
    %c0_i32 = arith.constant 0 : i32
    %c0_i32_0 = arith.constant 0 : i32
    return %c0_i32, %arg0 : i32, i32
  }
  func.func @transform_11(%arg0: i32) -> (i32, i32) {
    %c0_i32 = arith.constant 0 : i32
    %c0_i32_0 = arith.constant 0 : i32
    return %c0_i32, %arg0 : i32, i32
  }
  func.func @transform_12(%arg0: i32) -> (i32, i32) {
    %c0_i32 = arith.constant 0 : i32
    %c0_i32_0 = arith.constant 0 : i32
    return %c0_i32, %arg0 : i32, i32
  }
}

</mosaic_0001>

<llo_original>
// kernel: tpu_custom_call.1
$region0: #{tpu_custom_call.1}
  #allocation0 [shape = 'u32[]', space=smem, size = 0x4, offset = 0x4, fixed_abs, tag = 'smem constant byte address 0x4 - core index']
  #allocation1 [shape = 'u32[144,128]{1,0:T(1,128)}', space=vmem, size = 0x12000, scoped, tag = 'internal scratch']
  #allocation2 [shape = 'f32[1,1]{1,0:T(1,128)S(1)}', space=vmem, size = 0x200, scoped, tag = 'scoped memory for tpu_custom_call.1']
  %s0 = inlined_call_operand.vmem [shape: f32[24,128], index: 0, kind: input, shape index: {}]
  %s1 = inlined_call_operand.vmem [shape: f32[32,128], index: 1, kind: input, shape index: {}]
  %s2 = inlined_call_operand.vmem [shape: f32[1,128], index: 2, kind: input, shape index: {}]
  %s3 = inlined_call_operand.vmem [shape: f32[64,24], index: 3, kind: input, shape index: {}]
  %s4 = inlined_call_operand.vmem [shape: f32[64,32], index: 4, kind: input, shape index: {}]
  %s5 = inlined_call_operand.vmem [shape: f32[64,1], index: 5, kind: input, shape index: {}]
  %s6 = inlined_call_operand.vmem [shape: f32[32,64], index: 6, kind: input, shape index: {}]
  %s7 = inlined_call_operand.vmem [shape: f32[32,1], index: 7, kind: input, shape index: {}]
  %s8 = inlined_call_operand.vmem [shape: f32[32,1], index: 8, kind: input, shape index: {}]
  %s9 = inlined_call_operand.<no memory space> [shape: f32[1,1], index: 9, kind: input, shape index: {}]
  %s10 = inlined_call_operand.hbm [shape: f32[1,128], index: 10, kind: output, shape index: {0}]
  %s11 = inlined_call_operand.hbm [shape: f32[1,128], index: 11, kind: output, shape index: {1}]
  %s12 = inlined_call_operand.hbm [shape: f32[1,128], index: 12, kind: output, shape index: {2}]
  %13 = xla_tuple %s10, %s11, %s12
  %s14 = sld [smem:[#allocation0]]
  $region66: #{tpu_custom_call.1} parent=0
    _
  %s16 = ssub.s32 1, %s14
  %s17 = scalar_select 0, %s16, %s14
  %v18 = vstv %s9
  %19 = vst [vmem:[#allocation2] sm:$0x1] %v18
  $region1: #{tpu_custom_call.1} parent=0
    #allocation3 [shape = 'u8[512]{0}', space=vmem, size = 0x400, scoped, tag = 'output window, operand 0, single buffered']
    #allocation4 [shape = 's32[1]{0}', space=sflag, size = 0x4, scoped, tag = 'scoped memory for tpu_custom_call.1']
    #allocation5 [shape = 'u8[512]{0}', space=vmem, size = 0x400, scoped, tag = 'output window, operand 1, single buffered']
    #allocation6 [shape = 's32[1]{0}', space=sflag, size = 0x4, scoped, tag = 'scoped memory for tpu_custom_call.1']
    #allocation7 [shape = 'u8[512]{0}', space=vmem, size = 0x400, scoped, tag = 'output window, operand 2, single buffered']
    %20 = vsyncpa [#allocation4], 0
    %21 = vsyncpa [#allocation6], 0
    // Predicated region
    $region2: #{tpu_custom_call.1} parent=1 // pred_check
      _
    $region3: #{tpu_custom_call.1} parent=1 // pred_check_branch
      %23 = sbr.rel (0) target = $region5
    $region4: #{tpu_custom_call.1} parent=1 // pred_region
      _
    $region5: #{tpu_custom_call.1} parent=1 // pred_fallthru
      _
    // Predicated region
    $region6: #{tpu_custom_call.1} parent=1 // pred_check
      _
    $region7: #{tpu_custom_call.1} parent=1 // pred_check_branch
      %25 = sbr.rel (0) target = $region9
    $region8: #{tpu_custom_call.1} parent=1 // pred_region
      _
    $region9: #{tpu_custom_call.1} parent=1 // pred_fallthru
      _
    // Predicated region
    $region10: #{tpu_custom_call.1} parent=1 // pred_check
      _
    $region11: #{tpu_custom_call.1} parent=1 // pred_check_branch
      %27 = sbr.rel (0) target = $region13
    $region12: #{tpu_custom_call.1} parent=1 // pred_region
      _
    $region13: #{tpu_custom_call.1} parent=1 // pred_fallthru
      _
    // Predicated region
    $region14: #{tpu_custom_call.1} parent=1 // pred_check
      _
    $region15: #{tpu_custom_call.1} parent=1 // pred_check_branch
      %29 = sbr.rel (0) target = $region17
    $region16: #{tpu_custom_call.1} parent=1 // pred_region
      _
    $region17: #{tpu_custom_call.1} parent=1 // pred_fallthru
      _
    // Predicated region
    $region18: #{tpu_custom_call.1} parent=1 // pred_check
      _
    $region19: #{tpu_custom_call.1} parent=1 // pred_check_branch
      %31 = sbr.rel (0) target = $region21
    $region20: #{tpu_custom_call.1} parent=1 // pred_region
      _
    $region21: #{tpu_custom_call.1} parent=1 // pred_fallthru
      _
    // Predicated region
    $region22: #{tpu_custom_call.1} parent=1 // pred_check
      _
    $region23: #{tpu_custom_call.1} parent=1 // pred_check_branch
      %33 = sbr.rel (0) target = $region25
    $region24: #{tpu_custom_call.1} parent=1 // pred_region
      _
    $region25: #{tpu_custom_call.1} parent=1 // pred_fallthru
      _
    // Predicated region
    $region26: #{tpu_custom_call.1} parent=1 // pred_check
      _
    $region27: #{tpu_custom_call.1} parent=1 // pred_check_branch
      %35 = sbr.rel (0) target = $region29
    $region28: #{tpu_custom_call.1} parent=1 // pred_region
      _
    $region29: #{tpu_custom_call.1} parent=1 // pred_fallthru
      _
    // Predicated region
    $region30: #{tpu_custom_call.1} parent=1 // pred_check
      _
    $region31: #{tpu_custom_call.1} parent=1 // pred_check_branch
      %37 = sbr.rel (0) target = $region33
    $region32: #{tpu_custom_call.1} parent=1 // pred_region
      _
    $region33: #{tpu_custom_call.1} parent=1 // pred_fallthru
      _
    // Predicated region
    $region34: #{tpu_custom_call.1} parent=1 // pred_check
      _
    $region35: #{tpu_custom_call.1} parent=1 // pred_check_branch
      %39 = sbr.rel (0) target = $region37
    $region36: #{tpu_custom_call.1} parent=1 // pred_region
      _
    $region37: #{tpu_custom_call.1} parent=1 // pred_fallthru
      _
    // Predicated region
    $region38: #{tpu_custom_call.1} parent=1 // pred_check
      _
    $region39: #{tpu_custom_call.1} parent=1 // pred_check_branch
      %41 = sbr.rel (0) target = $region41
    $region40: #{tpu_custom_call.1} parent=1 // pred_region
      _
    $region41: #{tpu_custom_call.1} parent=1 // pred_fallthru
      _
    %v42 = vld [vmem:[%s0] sm:$0xff]
    %v43 = vld [vmem:[%s0 + $0x8] sm:$0xff]
    %v44 = vld [vmem:[%s0 + $0x10] sm:$0xff]
    %v45 = vld [vmem:[%s1] sm:$0xff]
    %v46 = vld [vmem:[%s1 + $0x8] sm:$0xff]
    %v47 = vld [vmem:[%s1 + $0x10] sm:$0xff]
    %v48 = vld [vmem:[%s1 + $0x18] sm:$0xff]
    %v49 = vld [vmem:[%s3] sm:$0xff]
    %v50 = vld [vmem:[%s3 + $0x8] sm:$0xff]
    %v51 = vld [vmem:[%s3 + $0x10] sm:$0xff]
    %v52 = vld [vmem:[%s3 + $0x18] sm:$0xff]
    %v53 = vld [vmem:[%s3 + $0x20] sm:$0xff]
    %v54 = vld [vmem:[%s3 + $0x28] sm:$0xff]
    %v55 = vld [vmem:[%s3 + $0x30] sm:$0xff]
    %v56 = vld [vmem:[%s3 + $0x38] sm:$0xff]
    %v57 = vld [vmem:[%s4] sm:$0xff]
    %v58 = vld [vmem:[%s4 + $0x8] sm:$0xff]
    %v59 = vld [vmem:[%s4 + $0x10] sm:$0xff]
    %v60 = vld [vmem:[%s4 + $0x18] sm:$0xff]
    %v61 = vld [vmem:[%s4 + $0x20] sm:$0xff]
    %v62 = vld [vmem:[%s4 + $0x28] sm:$0xff]
    %v63 = vld [vmem:[%s4 + $0x30] sm:$0xff]
    %v64 = vld [vmem:[%s4 + $0x38] sm:$0xff]
    %vm65 = vcmask 261120
    %v67 = vsel %vm65, %v57, 0
    %v70 = vsel %vm65, %v58, 0
    %v73 = vsel %vm65, %v59, 0
    %v76 = vsel %vm65, %v60, 0
    %v79 = vsel %vm65, %v61, 0
    %v82 = vsel %vm65, %v62, 0
    %v85 = vsel %vm65, %v63, 0
    %v88 = vsel %vm65, %v64, 0
    %90 = vmatprep.subr.mxu0 0.0
    %91 = vmatpush1.msra.mxu0 %v45
    %92 = vmatprep.subr.mxu0 0.0
    %93 = vmatpush1.msra.mxu0 %v46
    %94 = vmatprep.subr.mxu0 0.0
    %95 = vmatpush1.msra.mxu0 %v47
    %96 = vmatprep.subr.mxu0 0.0
    %97 = vmatpush1.msra.mxu0 %v48
    %98 = vmatprep.subr.mxu0 0.0
    %99 = vmatpush1.msra.mxu0 0.0
    %100 = vmatprep.subr.mxu0 0.0
    %101 = vmatpush1.msra.mxu0 0.0
    %102 = vmatprep.subr.mxu0 0.0
    %103 = vmatpush1.msra.mxu0 0.0
    %104 = vmatprep.subr.mxu0 0.0
    %105 = vmatpush1.msra.mxu0 0.0
    %106 = vmatprep.subr.mxu0 0.0
    %107 = vmatpush1.msra.mxu0 0.0
    %108 = vmatprep.subr.mxu0 0.0
    %109 = vmatpush1.msra.mxu0 0.0
    %110 = vmatprep.subr.mxu0 0.0
    %111 = vmatpush1.msra.mxu0 0.0
    %112 = vmatprep.subr.mxu0 0.0
    %113 = vmatpush1.msra.mxu0 0.0
    %114 = vmatprep.subr.mxu0 0.0
    %115 = vmatpush1.msra.mxu0 0.0
    %116 = vmatprep.subr.mxu0 0.0
    %117 = vmatpush1.msra.mxu0 0.0
    %118 = vmatprep.subr.mxu0 0.0
    %119 = vmatpush1.msra.mxu0 0.0
    %120 = vmatprep.subr.mxu0 0.0
    %121 = vmatpush1.msra.mxu0 0.0
    %122 = vmatprep.subr.mxu0 0.0
    %123 = vmatpush1.msra.mxu0 0.0
    %124 = vmatprep.subr.mxu0 0.0
    %125 = vmatpush1.msra.mxu0 0.0
    %126 = vmatprep.subr.mxu0 0.0
    %127 = vmatpush1.msra.mxu0 0.0
    %128 = vmatprep.subr.mxu0 0.0
    %129 = vmatpush1.msra.mxu0 0.0
    %130 = vmatprep.subr.mxu0 0.0
    %131 = vmatpush1.msra.mxu0 0.0
    %132 = vmatprep.subr.mxu0 0.0
    %133 = vmatpush1.msra.mxu0 0.0
    %134 = vmatprep.subr.mxu0 0.0
    %135 = vmatpush1.msra.mxu0 0.0
    %136 = vmatprep.subr.mxu0 0.0
    %137 = vmatpush1.msra.mxu0 0.0
    %138 = vmatprep.subr.mxu0 0.0
    %139 = vmatpush1.msra.mxu0 0.0
    %140 = vmatprep.subr.mxu0 0.0
    %141 = vmatpush1.msra.mxu0 0.0
    %142 = vmatprep.subr.mxu0 0.0
    %143 = vmatpush1.msra.mxu0 0.0
    %144 = vmatprep.subr.mxu0 0.0
    %145 = vmatpush1.msra.mxu0 0.0
    %146 = vmatprep.subr.mxu0 0.0
    %147 = vmatpush1.msra.mxu0 0.0
    %148 = vmatprep.subr.mxu0 0.0
    %149 = vmatpush1.msra.mxu0 0.0
    %150 = vmatprep.subr.mxu0 0.0
    %151 = vmatpush1.msra.mxu0 0.0
    %152 = vmatprep.subr.mxu0 0.0
    %153 = vmatpush1.msra.mxu0 0.0
    %154 = vmatprep.mubr.f32.mxu0 0.0
    %155 = vmatmul.mubr.f32.gmra.mrb[0].mxu0 %v67
    %v156 = vpop.f32.mrb[0].mxu0
    %v157 = vadd.f32 0.0, %v156
    %v158 = vpop.f32.mrb[0].mxu0
    %159 = vmatprep.mubr.f32.mxu0 0.0
    %160 = vmatmul.mubr.f32.gmra.mrb[0].mxu0 %v70
    %v161 = vpop.f32.mrb[0].mxu0
    %v162 = vadd.f32 0.0, %v161
    %v163 = vpop.f32.mrb[0].mxu0
    %164 = vmatprep.mubr.f32.mxu0 0.0
    %165 = vmatmul.mubr.f32.gmra.mrb[0].mxu0 %v73
    %v166 = vpop.f32.mrb[0].mxu0
    %v167 = vadd.f32 0.0, %v166
    %v168 = vpop.f32.mrb[0].mxu0
    %169 = vmatprep.mubr.f32.mxu0 0.0
    %170 = vmatmul.mubr.f32.gmra.mrb[0].mxu0 %v76
    %v171 = vpop.f32.mrb[0].mxu0
    %v172 = vadd.f32 0.0, %v171
    %v173 = vpop.f32.mrb[0].mxu0
    %174 = vmatprep.mubr.f32.mxu0 0.0
    %175 = vmatmul.mubr.f32.gmra.mrb[0].mxu0 %v79
    %v176 = vpop.f32.mrb[0].mxu0
    %v177 = vadd.f32 0.0, %v176
    %v178 = vpop.f32.mrb[0].mxu0
    %179 = vmatprep.mubr.f32.mxu0 0.0
    %180 = vmatmul.mubr.f32.gmra.mrb[0].mxu0 %v82
    %v181 = vpop.f32.mrb[0].mxu0
    %v182 = vadd.f32 0.0, %v181
    %v183 = vpop.f32.mrb[0].mxu0
    %184 = vmatprep.mubr.f32.mxu0 0.0
    %185 = vmatmul.mubr.f32.gmra.mrb[0].mxu0 %v85
    %v186 = vpop.f32.mrb[0].mxu0
    %v187 = vadd.f32 0.0, %v186
    %v188 = vpop.f32.mrb[0].mxu0
    %189 = vmatprep.mubr.f32.mxu0 0.0
    %190 = vmatmul.mubr.f32.gmra.mrb[0].mxu0 %v88
    %v191 = vpop.f32.mrb[0].mxu0
    %v192 = vadd.f32 0.0, %v191
    %v193 = vpop.f32.mrb[0].mxu0
    %194 = vdwg.mxu0
    %vm195 = vcmask 195584
    %v197 = vsel %vm195, %v49, 0
    %v200 = vsel %vm195, %v50, 0
    %v203 = vsel %vm195, %v51, 0
    %v206 = vsel %vm195, %v52, 0
    %v209 = vsel %vm195, %v53, 0
    %v212 = vsel %vm195, %v54, 0
    %v215 = vsel %vm195, %v55, 0
    %v218 = vsel %vm195, %v56, 0
    %220 = vmatprep.subr.mxu0 0.0
    %221 = vmatpush1.msra.mxu0 %v42
    %222 = vmatprep.subr.mxu0 0.0
    %223 = vmatpush1.msra.mxu0 %v43
    %224 = vmatprep.subr.mxu0 0.0
    %225 = vmatpush1.msra.mxu0 %v44
    %226 = vmatprep.subr.mxu0 0.0
    %227 = vmatpush1.msra.mxu0 0.0
    %228 = vmatprep.subr.mxu0 0.0
    %229 = vmatpush1.msra.mxu0 0.0
    %230 = vmatprep.subr.mxu0 0.0
    %231 = vmatpush1.msra.mxu0 0.0
    %232 = vmatprep.subr.mxu0 0.0
    %233 = vmatpush1.msra.mxu0 0.0
    %234 = vmatprep.subr.mxu0 0.0
    %235 = vmatpush1.msra.mxu0 0.0
    %236 = vmatprep.subr.mxu0 0.0
    %237 = vmatpush1.msra.mxu0 0.0
    %238 = vmatprep.subr.mxu0 0.0
    %239 = vmatpush1.msra.mxu0 0.0
    %240 = vmatprep.subr.mxu0 0.0
    %241 = vmatpush1.msra.mxu0 0.0
    %242 = vmatprep.subr.mxu0 0.0
    %243 = vmatpush1.msra.mxu0 0.0
    %244 = vmatprep.subr.mxu0 0.0
    %245 = vmatpush1.msra.mxu0 0.0
    %246 = vmatprep.subr.mxu0 0.0
    %247 = vmatpush1.msra.mxu0 0.0
    %248 = vmatprep.subr.mxu0 0.0
    %249 = vmatpush1.msra.mxu0 0.0
    %250 = vmatprep.subr.mxu0 0.0
    %251 = vmatpush1.msra.mxu0 0.0
    %252 = vmatprep.subr.mxu0 0.0
    %253 = vmatpush1.msra.mxu0 0.0
    %254 = vmatprep.subr.mxu0 0.0
    %255 = vmatpush1.msra.mxu0 0.0
    %256 = vmatprep.subr.mxu0 0.0
    %257 = vmatpush1.msra.mxu0 0.0
    %258 = vmatprep.subr.mxu0 0.0
    %259 = vmatpush1.msra.mxu0 0.0
    %260 = vmatprep.subr.mxu0 0.0
    %261 = vmatpush1.msra.mxu0 0.0
    %262 = vmatprep.subr.mxu0 0.0
    %263 = vmatpush1.msra.mxu0 0.0
    %264 = vmatprep.subr.mxu0 0.0
    %265 = vmatpush1.msra.mxu0 0.0
    %266 = vmatprep.subr.mxu0 0.0
    %267 = vmatpush1.msra.mxu0 0.0
    %268 = vmatprep.subr.mxu0 0.0
    %269 = vmatpush1.msra.mxu0 0.0
    %270 = vmatprep.subr.mxu0 0.0
    %271 = vmatpush1.msra.mxu0 0.0
    %272 = vmatprep.subr.mxu0 0.0
    %273 = vmatpush1.msra.mxu0 0.0
    %274 = vmatprep.subr.mxu0 0.0
    %275 = vmatpush1.msra.mxu0 0.0
    %276 = vmatprep.subr.mxu0 0.0
    %277 = vmatpush1.msra.mxu0 0.0
    %278 = vmatprep.subr.mxu0 0.0
    %279 = vmatpush1.msra.mxu0 0.0
    %280 = vmatprep.subr.mxu0 0.0
    %281 = vmatpush1.msra.mxu0 0.0
    %282 = vmatprep.subr.mxu0 0.0
    %283 = vmatpush1.msra.mxu0 0.0
    %284 = vmatprep.mubr.f32.mxu0 0.0
    %285 = vmatmul.mubr.f32.gmra.mrb[0].mxu0 %v197
    %v286 = vpop.f32.mrb[0].mxu0
    %v287 = vadd.f32 %v157, %v286
    %v288 = vpop.f32.mrb[0].mxu0
    %289 = vmatprep.mubr.f32.mxu0 0.0
    %290 = vmatmul.mubr.f32.gmra.mrb[0].mxu0 %v200
    %v291 = vpop.f32.mrb[0].mxu0
    %v292 = vadd.f32 %v162, %v291
    %v293 = vpop.f32.mrb[0].mxu0
    %294 = vmatprep.mubr.f32.mxu0 0.0
    %295 = vmatmul.mubr.f32.gmra.mrb[0].mxu0 %v203
    %v296 = vpop.f32.mrb[0].mxu0
    %v297 = vadd.f32 %v167, %v296
    %v298 = vpop.f32.mrb[0].mxu0
    %299 = vmatprep.mubr.f32.mxu0 0.0
    %300 = vmatmul.mubr.f32.gmra.mrb[0].mxu0 %v206
    %v301 = vpop.f32.mrb[0].mxu0
    %v302 = vadd.f32 %v172, %v301
    %v303 = vpop.f32.mrb[0].mxu0
    %304 = vmatprep.mubr.f32.mxu0 0.0
    %305 = vmatmul.mubr.f32.gmra.mrb[0].mxu0 %v209
    %v306 = vpop.f32.mrb[0].mxu0
    %v307 = vadd.f32 %v177, %v306
    %v308 = vpop.f32.mrb[0].mxu0
    %309 = vmatprep.mubr.f32.mxu0 0.0
    %310 = vmatmul.mubr.f32.gmra.mrb[0].mxu0 %v212
    %v311 = vpop.f32.mrb[0].mxu0
    %v312 = vadd.f32 %v182, %v311
    %v313 = vpop.f32.mrb[0].mxu0
    %314 = vmatprep.mubr.f32.mxu0 0.0
    %315 = vmatmul.mubr.f32.gmra.mrb[0].mxu0 %v215
    %v316 = vpop.f32.mrb[0].mxu0
    %v317 = vadd.f32 %v187, %v316
    %v318 = vpop.f32.mrb[0].mxu0
    %319 = vmatprep.mubr.f32.mxu0 0.0
    %320 = vmatmul.mubr.f32.gmra.mrb[0].mxu0 %v218
    %v321 = vpop.f32.mrb[0].mxu0
    %v322 = vadd.f32 %v192, %v321
    %v323 = vpop.f32.mrb[0].mxu0
    %324 = vdwg.mxu0
    %v325 = vld [vmem:[%s5] sm:$0xff]
    %v326 = vld [vmem:[%s5 + $0x8] sm:$0xff]
    %v327 = vld [vmem:[%s5 + $0x10] sm:$0xff]
    %v328 = vld [vmem:[%s5 + $0x18] sm:$0xff]
    %v329 = vld [vmem:[%s5 + $0x20] sm:$0xff]
    %v330 = vld [vmem:[%s5 + $0x28] sm:$0xff]
    %v331 = vld [vmem:[%s5 + $0x30] sm:$0xff]
    %v332 = vld [vmem:[%s5 + $0x38] sm:$0xff]
    %334 = vset.pattern.permute.xlu0 0
    %335 = vperm.xlu0 %334, %v325
    %v336 = vpop.permute.xlu0 %335
    %339 = vset.pattern.permute.xlu0 0
    %340 = vperm.xlu0 %339, %v326
    %v341 = vpop.permute.xlu0 %340
    %344 = vset.pattern.permute.xlu0 0
    %345 = vperm.xlu0 %344, %v327
    %v346 = vpop.permute.xlu0 %345
    %349 = vset.pattern.permute.xlu0 0
    %350 = vperm.xlu0 %349, %v328
    %v351 = vpop.permute.xlu0 %350
    %354 = vset.pattern.permute.xlu0 0
    %355 = vperm.xlu0 %354, %v329
    %v356 = vpop.permute.xlu0 %355
    %359 = vset.pattern.permute.xlu0 0
    %360 = vperm.xlu0 %359, %v330
    %v361 = vpop.permute.xlu0 %360
    %364 = vset.pattern.permute.xlu0 0
    %365 = vperm.xlu0 %364, %v331
    %v366 = vpop.permute.xlu0 %365
    %369 = vset.pattern.permute.xlu0 0
    %370 = vperm.xlu0 %369, %v332
    %v371 = vpop.permute.xlu0 %370
    %v373 = vadd.f32 %v287, %v336
    %v374 = vadd.f32 %v292, %v341
    %v375 = vadd.f32 %v297, %v346
    %v376 = vadd.f32 %v302, %v351
    %v377 = vadd.f32 %v307, %v356
    %v378 = vadd.f32 %v312, %v361
    %v379 = vadd.f32 %v317, %v366
    %v380 = vadd.f32 %v322, %v371
    %v381 = vmax.f32 %v373, 0.0
    %v382 = vmax.f32 %v374, 0.0
    %v383 = vmax.f32 %v375, 0.0
    %v384 = vmax.f32 %v376, 0.0
    %v385 = vmax.f32 %v377, 0.0
    %v386 = vmax.f32 %v378, 0.0
    %v387 = vmax.f32 %v379, 0.0
    %v388 = vmax.f32 %v380, 0.0
    %v389 = vld [vmem:[%s6] sm:$0xff]
    %v390 = vld [vmem:[%s6 + $0x8] sm:$0xff]
    %v391 = vld [vmem:[%s6 + $0x10] sm:$0xff]
    %v392 = vld [vmem:[%s6 + $0x18] sm:$0xff]
    %v393 = vld [vmem:[%s7] sm:$0xff]
    %v394 = vld [vmem:[%s7 + $0x8] sm:$0xff]
    %v395 = vld [vmem:[%s7 + $0x10] sm:$0xff]
    %v396 = vld [vmem:[%s7 + $0x18] sm:$0xff]
    %398 = vset.pattern.permute.xlu0 0
    %399 = vperm.xlu0 %398, %v393
    %v400 = vpop.permute.xlu0 %399
    %403 = vset.pattern.permute.xlu0 0
    %404 = vperm.xlu0 %403, %v394
    %v405 = vpop.permute.xlu0 %404
    %408 = vset.pattern.permute.xlu0 0
    %409 = vperm.xlu0 %408, %v395
    %v410 = vpop.permute.xlu0 %409
    %413 = vset.pattern.permute.xlu0 0
    %414 = vperm.xlu0 %413, %v396
    %v415 = vpop.permute.xlu0 %414
    %vm417 = vcmask 523264
    %v419 = vsel %vm417, %v389, 0
    %v422 = vsel %vm417, %v390, 0
    %v425 = vsel %vm417, %v391, 0
    %v428 = vsel %vm417, %v392, 0
    %430 = vmatprep.subr.mxu0 0.0
    %431 = vmatpush1.msra.mxu0 %v381
    %432 = vmatprep.subr.mxu0 0.0
    %433 = vmatpush1.msra.mxu0 %v382
    %434 = vmatprep.subr.mxu0 0.0
    %435 = vmatpush1.msra.mxu0 %v383
    %436 = vmatprep.subr.mxu0 0.0
    %437 = vmatpush1.msra.mxu0 %v384
    %438 = vmatprep.subr.mxu0 0.0
    %439 = vmatpush1.msra.mxu0 %v385
    %440 = vmatprep.subr.mxu0 0.0
    %441 = vmatpush1.msra.mxu0 %v386
    %442 = vmatprep.subr.mxu0 0.0
    %443 = vmatpush1.msra.mxu0 %v387
    %444 = vmatprep.subr.mxu0 0.0
    %445 = vmatpush1.msra.mxu0 %v388
    %446 = vmatprep.subr.mxu0 0.0
    %447 = vmatpush1.msra.mxu0 0.0
    %448 = vmatprep.subr.mxu0 0.0
    %449 = vmatpush1.msra.mxu0 0.0
    %450 = vmatprep.subr.mxu0 0.0
    %451 = vmatpush1.msra.mxu0 0.0
    %452 = vmatprep.subr.mxu0 0.0
    %453 = vmatpush1.msra.mxu0 0.0
    %454 = vmatprep.subr.mxu0 0.0
    %455 = vmatpush1.msra.mxu0 0.0
    %456 = vmatprep.subr.mxu0 0.0
    %457 = vmatpush1.msra.mxu0 0.0
    %458 = vmatprep.subr.mxu0 0.0
    %459 = vmatpush1.msra.mxu0 0.0
    %460 = vmatprep.subr.mxu0 0.0
    %461 = vmatpush1.msra.mxu0 0.0
    %462 = vmatprep.subr.mxu0 0.0
    %463 = vmatpush1.msra.mxu0 0.0
    %464 = vmatprep.subr.mxu0 0.0
    %465 = vmatpush1.msra.mxu0 0.0
    %466 = vmatprep.subr.mxu0 0.0
    %467 = vmatpush1.msra.mxu0 0.0
    %468 = vmatprep.subr.mxu0 0.0
    %469 = vmatpush1.msra.mxu0 0.0
    %470 = vmatprep.subr.mxu0 0.0
    %471 = vmatpush1.msra.mxu0 0.0
    %472 = vmatprep.subr.mxu0 0.0
    %473 = vmatpush1.msra.mxu0 0.0
    %474 = vmatprep.subr.mxu0 0.0
    %475 = vmatpush1.msra.mxu0 0.0
    %476 = vmatprep.subr.mxu0 0.0
    %477 = vmatpush1.msra.mxu0 0.0
    %478 = vmatprep.subr.mxu0 0.0
    %479 = vmatpush1.msra.mxu0 0.0
    %480 = vmatprep.subr.mxu0 0.0
    %481 = vmatpush1.msra.mxu0 0.0
    %482 = vmatprep.subr.mxu0 0.0
    %483 = vmatpush1.msra.mxu0 0.0
    %484 = vmatprep.subr.mxu0 0.0
    %485 = vmatpush1.msra.mxu0 0.0
    %486 = vmatprep.subr.mxu0 0.0
    %487 = vmatpush1.msra.mxu0 0.0
    %488 = vmatprep.subr.mxu0 0.0
    %489 = vmatpush1.msra.mxu0 0.0
    %490 = vmatprep.subr.mxu0 0.0
    %491 = vmatpush1.msra.mxu0 0.0
    %492 = vmatprep.subr.mxu0 0.0
    %493 = vmatpush1.msra.mxu0 0.0
    %494 = vmatprep.mubr.f32.mxu0 0.0
    %495 = vmatmul.mubr.f32.gmra.mrb[0].mxu0 %v419
    %v496 = vpop.f32.mrb[0].mxu0
    %v497 = vadd.f32 %v400, %v496
    %v498 = vpop.f32.mrb[0].mxu0
    %499 = vmatprep.mubr.f32.mxu0 0.0
    %500 = vmatmul.mubr.f32.gmra.mrb[0].mxu0 %v422
    %v501 = vpop.f32.mrb[0].mxu0
    %v502 = vadd.f32 %v405, %v501
    %v503 = vpop.f32.mrb[0].mxu0
    %504 = vmatprep.mubr.f32.mxu0 0.0
    %505 = vmatmul.mubr.f32.gmra.mrb[0].mxu0 %v425
    %v506 = vpop.f32.mrb[0].mxu0
    %v507 = vadd.f32 %v410, %v506
    %v508 = vpop.f32.mrb[0].mxu0
    %509 = vmatprep.mubr.f32.mxu0 0.0
    %510 = vmatmul.mubr.f32.gmra.mrb[0].mxu0 %v428
    %v511 = vpop.f32.mrb[0].mxu0
    %v512 = vadd.f32 %v415, %v511
    %v513 = vpop.f32.mrb[0].mxu0
    %514 = vdwg.mxu0
    %v515 = vmax.f32 %v497, 0.0
    %v516 = vmax.f32 %v502, 0.0
    %v517 = vmax.f32 %v507, 0.0
    %v518 = vmax.f32 %v512, 0.0
    %v519 = vld [vmem:[%s8] sm:$0xff]
    %v520 = vld [vmem:[%s8 + $0x8] sm:$0xff]
    %v521 = vld [vmem:[%s8 + $0x10] sm:$0xff]
    %v522 = vld [vmem:[%s8 + $0x18] sm:$0xff]
    %524 = vset.pattern.permute.xlu0 0
    %525 = vperm.xlu0 %524, %v519
    %v526 = vpop.permute.xlu0 %525
    %529 = vset.pattern.permute.xlu0 0
    %530 = vperm.xlu0 %529, %v520
    %v531 = vpop.permute.xlu0 %530
    %534 = vset.pattern.permute.xlu0 0
    %535 = vperm.xlu0 %534, %v521
    %v536 = vpop.permute.xlu0 %535
    %539 = vset.pattern.permute.xlu0 0
    %540 = vperm.xlu0 %539, %v522
    %v541 = vpop.permute.xlu0 %540
    %v543 = vmul.f32 %v515, %v526
    %v544 = vmul.f32 %v516, %v531
    %v545 = vmul.f32 %v517, %v536
    %v546 = vmul.f32 %v518, %v541
    %v547 = vadd.f32 %v543, %v544
    %v548 = vadd.f32 %v547, %v545
    %v549 = vadd.f32 %v548, %v546
    %v550 = vrot.slane %v549, 4
    %v551 = vadd.f32 %v549, %v550
    %v552 = vrot.slane %v551, 2
    %v553 = vadd.f32 %v551, %v552
    %v554 = vrot.slane %v553, 1
    %v555 = vadd.f32 %v553, %v554
    %v556 = vld [vmem:[#allocation2] sm:$0x1]
    %558 = vset.pattern.permute.xlu0 0
    %559 = vperm.xlu0 %558, %v556
    %v560 = vpop.permute.xlu0 %559
    %v562 = vlaneseq
    %v563 = vshrl.u32 %v562, 7
    %v564 = vsub.s32 0, %v563
    %v565 = vrot.slane %v560, %v564
    %v566 = vadd.f32 %v555, %v565
    %567 = vst [vmem:[#allocation3] sm:$0x1] %v566
    %v568 = vxor.u32 %v566, 2147483648
    %v569 = vmul.f32 %v568, 1.442695
    %v570 = vpow.pop %v569
    %v571 = vadd.f32 %v570, 1.0
    %v572 = vrcp.pop %v571
    %v573 = vmul.f32 1.0, %v572
    %v574 = vmax.f32 %v573, 1e-07
    %v575 = vmin.f32 %v574, 0.9999999
    %576 = vst [vmem:[#allocation5] sm:$0x1] %v575
    %v577 = vld [vmem:[%s2] sm:$0x1]
    %v578 = vlog2.pop %v575
    %v579 = vmul.f32 %v578, 0.6931472
    %v580 = vmul.f32 %v577, %v579
    %v581 = vsub.f32 1.0, %v577
    %v582 = vsub.f32 1.0, %v575
    %v583 = vlog2.pop %v582
    %v584 = vmul.f32 %v583, 0.6931472
    %v585 = vmul.f32 %v581, %v584
    %v586 = vadd.f32 %v580, %v585
    %v587 = vsub.f32 0.0, %v586
    %588 = vst [vmem:[#allocation7] sm:$0x1] %v587
    // Predicated region
    $region42: #{tpu_custom_call.1} parent=1 // pred_check
      _
    $region43: #{tpu_custom_call.1} parent=1 // pred_check_branch
      %590 = sbr.rel (0) target = $region45
    $region44: #{tpu_custom_call.1} parent=1 // pred_region
      %s592 = ssub.s32 16, 16
      %593 = vsyncadd [#allocation4], %s592
      %s595 = sshll.u32 [#allocation3], 4
      %s596 = int_to_ptr.vmem [resolvable:$true] %s595
      %598 = dma.vmem_to_hbm [thread:$0]  %s596, 16, %s10, [#allocation4]
    $region45: #{tpu_custom_call.1} parent=1 // pred_fallthru
      _
    // Predicated region
    $region46: #{tpu_custom_call.1} parent=1 // pred_check
      _
    $region47: #{tpu_custom_call.1} parent=1 // pred_check_branch
      %600 = sbr.rel (0) target = $region49
    $region48: #{tpu_custom_call.1} parent=1 // pred_region
      %s602 = ssub.s32 16, 16
      %603 = vsyncadd [#allocation6], %s602
      %s605 = sshll.u32 [#allocation5], 4
      %s606 = int_to_ptr.vmem [resolvable:$true] %s605
      %608 = dma.vmem_to_hbm [thread:$0]  %s606, 16, %s11, [#allocation6]
    $region49: #{tpu_custom_call.1} parent=1 // pred_fallthru
      _
    // Predicated region
    $region50: #{tpu_custom_call.1} parent=1 // pred_check
      _
    $region51: #{tpu_custom_call.1} parent=1 // pred_check_branch
      %610 = sbr.rel (0) target = $region53
    $region52: #{tpu_custom_call.1} parent=1 // pred_region
      %s612 = ssub.s32 16, 16
      %613 = vsyncadd [#allocation6], %s612
      %s615 = sshll.u32 [#allocation7], 4
      %s616 = int_to_ptr.vmem [resolvable:$true] %s615
      %618 = dma.vmem_to_hbm [thread:$0]  %s616, 16, %s12, [#allocation6]
    $region53: #{tpu_custom_call.1} parent=1 // pred_fallthru
      _
    // Predicated region
    $region54: #{tpu_custom_call.1} parent=1 // pred_check
      _
    $region55: #{tpu_custom_call.1} parent=1 // pred_check_branch
      %620 = sbr.rel (0) target = $region57
    $region56: #{tpu_custom_call.1} parent=1 // pred_region
      %621 = dma.done [#allocation4], 16
    $region57: #{tpu_custom_call.1} parent=1 // pred_fallthru
      _
    // Predicated region
    $region58: #{tpu_custom_call.1} parent=1 // pred_check
      _
    $region59: #{tpu_custom_call.1} parent=1 // pred_check_branch
      %623 = sbr.rel (0) target = $region61
    $region60: #{tpu_custom_call.1} parent=1 // pred_region
      %624 = dma.done [#allocation6], 16
    $region61: #{tpu_custom_call.1} parent=1 // pred_fallthru
      _
    // Predicated region
    $region62: #{tpu_custom_call.1} parent=1 // pred_check
      _
    $region63: #{tpu_custom_call.1} parent=1 // pred_check_branch
      %626 = sbr.rel (0) target = $region65
    $region64: #{tpu_custom_call.1} parent=1 // pred_region
      %627 = dma.done [#allocation6], 16
    $region65: #{tpu_custom_call.1} parent=1 // pred_fallthru
      _
    %628 = vsyncpa [#allocation4], 1
    %629 = vsyncpa [#allocation6], 1

</llo_original>
